<compile_context>
chip_gen: v5e
topology: v5e:2x2
jax: 0.10.0
libtpu: 0.0.40
codegen_flags: <defaults>
</compile_context>

<pallas_src>
import functools

import jax
import jax.numpy as jnp
import numpy as np
from jax import lax
from jax.experimental import pallas as pl
from jax.experimental.pallas import tpu as pltpu


def _round_up(a: int, b: int) -> int:
    return ((a + b - 1) // b) * b


def _vmem_capacity_bytes() -> int:
    """Per-generation VMEM capacity (v5e/v6e: 128 MiB, v7x: 64 MiB)."""
    try:
        cap = int(pltpu.get_tpu_info().vmem_capacity_bytes)
        if cap > 0:
            return cap
    except Exception:
        pass
    return 64 * 1024 * 1024  # conservative fallback (v7x physical VMEM)


# ------------- fast path: whole x resident in VMEM, single launch -----------
def _pairnorm_small_kernel(x_ref, o_ref, *, mode, scale, eps, inv_n):
    x = x_ref[...].astype(jnp.float32)                       # (N, D)
    col_mean = jnp.sum(x, axis=0, keepdims=True) * inv_n     # (1, D)
    if mode == "PN-SI":
        xc = x - col_mean
        inv = scale * lax.rsqrt(eps + jnp.sum(xc * xc, axis=1, keepdims=True))
        o_ref[...] = (xc * inv).astype(o_ref.dtype)
    else:  # "PN-SCS"
        inv = scale * lax.rsqrt(eps + jnp.sum(x * x, axis=1, keepdims=True))
        o_ref[...] = (x * inv - col_mean).astype(o_ref.dtype)


# ------------- slow path pass 1: column sums (reduction over row tiles) -----
def _colsum_kernel(x_ref, sum_ref, *, n_rows, tile_n, ragged):
    i = pl.program_id(0)

    @pl.when(i == 0)
    def _():
        sum_ref[...] = jnp.zeros_like(sum_ref)

    x = x_ref[...].astype(jnp.float32)                        # (tile_n, D)
    if ragged:
        # Out-of-bounds rows of the last block hold unspecified data; zero
        # them before accumulating (stores beyond N are dropped by Pallas,
        # but reads must be masked for the reduction).
        row = lax.broadcasted_iota(jnp.int32, x.shape, 0) + i * tile_n
        x = jnp.where(row < n_rows, x, 0.0)
    sum_ref[...] += jnp.sum(x, axis=0, keepdims=True)


# ------------- slow path pass 2: per-row normalization ----------------------
def _pairnorm_kernel(x_ref, colsum_ref, o_ref, *, mode, scale, eps, inv_n):
    x = x_ref[...].astype(jnp.float32)                        # (tile_n, D)
    col_mean = colsum_ref[...] * inv_n                        # (1, D), fold 1/N here
    if mode == "PN-SI":
        xc = x - col_mean
        inv = scale * lax.rsqrt(eps + jnp.sum(xc * xc, axis=1, keepdims=True))
        o_ref[...] = (xc * inv).astype(o_ref.dtype)
    else:  # "PN-SCS"
        inv = scale * lax.rsqrt(eps + jnp.sum(x * x, axis=1, keepdims=True))
        o_ref[...] = (x * inv - col_mean).astype(o_ref.dtype)


def pair_norm(x, mode="PN-SI", scale=1.0, *, tile_n=None, force_two_pass=False):
    """x: (N, D) node-feature matrix. Matches PairNorm.forward."""
    assert mode in ("PN-SI", "PN-SCS")
    N, D = x.shape
    itemsize = x.dtype.itemsize
    eps = 1e-6
    scale = float(scale)
    inv_n = 1.0 / float(N)

    vmem_cap = _vmem_capacity_bytes()
    vmem_limit = (vmem_cap * 3) // 4          # leave headroom below physical

    # ----- fast path: everything resident in VMEM, single kernel launch -----
    # working set ~ double-buffered in + out + a few f32 temporaries
    fast_bytes = N * D * (2 * itemsize + 2 * itemsize + 3 * 4)
    if (not force_two_pass) and fast_bytes <= int(vmem_limit * 0.7):
        kernel = functools.partial(_pairnorm_small_kernel, mode=mode,
                                   scale=scale, eps=eps, inv_n=inv_n)
        return pl.pallas_call(
            kernel,
            out_shape=jax.ShapeDtypeStruct((N, D), x.dtype),
            grid_spec=pltpu.PrefetchScalarGridSpec(
                num_scalar_prefetch=0,
                grid=(1,),
                in_specs=[pl.BlockSpec((N, D), lambda i: (0, 0))],
                out_specs=pl.BlockSpec((N, D), lambda i: (0, 0))),
            compiler_params=pltpu.CompilerParams(
                dimension_semantics=("arbitrary",),
                vmem_limit_bytes=vmem_limit),
        )(x)

    # ----- slow path: two gridded passes over row tiles, no padding of x ----
    # Size tile_n from D and the VMEM budget: pass 2 needs roughly
    #   (2 x in + 2 x out) buffers + ~3 f32 temps per element.
    bytes_per_row = max(1, D * (2 * itemsize + 2 * itemsize + 3 * 4))
    if tile_n is None:
        tile_n = (int(vmem_limit * 0.6) // bytes_per_row) // 8 * 8
    tile_n = int(tile_n) // 8 * 8
    tile_n = max(8, min(tile_n, _round_up(N, 8)))
    grid = (pl.cdiv(N, tile_n),)
    ragged = (N % tile_n) != 0

    # pass 1: column sums, resident (1, D) accumulator across the row axis.
    colsum_kernel = functools.partial(_colsum_kernel, n_rows=N, tile_n=tile_n,
                                      ragged=ragged)
    col_sum = pl.pallas_call(
        colsum_kernel,
        out_shape=jax.ShapeDtypeStruct((1, D), jnp.float32),
        grid_spec=pltpu.PrefetchScalarGridSpec(
            num_scalar_prefetch=0,
            grid=grid,
            in_specs=[pl.BlockSpec((tile_n, D), lambda i: (i, 0))],
            out_specs=pl.BlockSpec((1, D), lambda i: (0, 0))),
        compiler_params=pltpu.CompilerParams(
            dimension_semantics=("arbitrary",),
            vmem_limit_bytes=vmem_limit),
    )(x)

    # pass 2: elementwise normalization; ragged-tail stores are discarded.
    norm_kernel = functools.partial(_pairnorm_kernel, mode=mode, scale=scale,
                                    eps=eps, inv_n=inv_n)
    out = pl.pallas_call(
        norm_kernel,
        out_shape=jax.ShapeDtypeStruct((N, D), x.dtype),
        grid_spec=pltpu.PrefetchScalarGridSpec(
            num_scalar_prefetch=0,
            grid=grid,
            in_specs=[pl.BlockSpec((tile_n, D), lambda i: (i, 0)),
                      pl.BlockSpec((1, D), lambda i: (0, 0))],
            out_specs=pl.BlockSpec((tile_n, D), lambda i: (i, 0))),
        compiler_params=pltpu.CompilerParams(
            dimension_semantics=("parallel",),
            vmem_limit_bytes=vmem_limit),
    )(x, col_sum)

    return out


def pair_norm_ref(x, mode="PN-SI", scale=1.0):
    """Pure-JAX reference matching the PyTorch forward."""
    col_mean = x.mean(axis=0)
    if mode == "PN-SI":
        xc = x - col_mean
        rn = jnp.sqrt(1e-6 + jnp.sum(xc * xc, axis=1, keepdims=True))
        return scale * xc / rn
    rn = jnp.sqrt(1e-6 + jnp.sum(x * x, axis=1, keepdims=True))
    return scale * x / rn - col_mean


if __name__ == "__main__":
    key = jax.random.PRNGKey(0)
    k1, k2 = jax.random.split(key)

    # Small graph-style feature matrices (N nodes, D features).
    x_small = jax.random.normal(k1, (100, 32), dtype=jnp.float32)
    x_big = jax.random.normal(k2, (1100, 160), dtype=jnp.float32)

    cases = [
        # (x, mode, scale, kwargs)
        (x_small, "PN-SI", 1.0, {}),                                    # fast path
        (x_small, "PN-SCS", 1.0, {}),                                   # fast path
        (x_big, "PN-SI", 2.0, {}),                                      # fast path
        (x_big, "PN-SI", 2.0, dict(force_two_pass=True, tile_n=256)),   # ragged grid
        (x_big, "PN-SCS", 1.0, dict(force_two_pass=True, tile_n=512)),  # ragged grid
        (x_small, "PN-SCS", 1.5, dict(force_two_pass=True, tile_n=64)), # ragged grid
    ]
    for x, mode, scale, kw in cases:
        out = jax.block_until_ready(pair_norm(x, mode, scale, **kw))
        ref = pair_norm_ref(x, mode, scale)
        np.testing.assert_allclose(np.asarray(out), np.asarray(ref),
                                   rtol=1e-5, atol=1e-5)

    print("KERNEL_OK")
</pallas_src>

<mosaic_0001>
module attributes {stable_mosaic.version = 11 : i64} {
  func.func @_pairnorm_small_kernel(%arg0: i32, %arg1: memref<100x32xf32, #tpu.memory_space<vmem>>, %arg2: memref<100x32xf32, #tpu.memory_space<vmem>>) attributes {dimension_semantics = [#tpu.dimension_semantics<arbitrary>], iteration_bounds = array<i64: 1>, scalar_prefetch = 0 : i64, scratch_operands = 0 : i64, tpu.core_type = #tpu.core_type<tc>, window_params = [{pipeline_mode = #tpu.pipeline_mode<synchronous>, transform_indices = @transform_0, window_bounds = array<i64: 100, 32>}, {pipeline_mode = #tpu.pipeline_mode<synchronous>, transform_indices = @transform_1, window_bounds = array<i64: 100, 32>}]} {
    %c0 = arith.constant 0 : index
    %c0_0 = arith.constant 0 : index
    %0 = vector.load %arg1[%c0, %c0_0] : memref<100x32xf32, #tpu.memory_space<vmem>>, vector<100x32xf32>
    %cst = arith.constant dense<0.000000e+00> : vector<32xf32>
    %1 = vector.multi_reduction <add>, %0, %cst [0] : vector<100x32xf32> to vector<32xf32>
    %2 = vector.shape_cast %1 : vector<32xf32> to vector<1x32xf32>
    %cst_1 = arith.constant 0.00999999977 : f32
    %3 = vector.broadcast %cst_1 : f32 to vector<1x32xf32>
    %4 = arith.mulf %2, %3 : vector<1x32xf32>
    %5 = vector.broadcast %4 : vector<1x32xf32> to vector<100x32xf32>
    %6 = arith.subf %0, %5 : vector<100x32xf32>
    %7 = arith.mulf %6, %6 : vector<100x32xf32>
    %cst_2 = arith.constant dense<0.000000e+00> : vector<100xf32>
    %8 = vector.multi_reduction <add>, %7, %cst_2 [1] : vector<100x32xf32> to vector<100xf32>
    %9 = vector.shape_cast %8 : vector<100xf32> to vector<100x1xf32>
    %cst_3 = arith.constant 9.99999997E-7 : f32
    %10 = vector.broadcast %cst_3 : f32 to vector<100x1xf32>
    %11 = arith.addf %10, %9 : vector<100x1xf32>
    %12 = math.rsqrt %11 : vector<100x1xf32>
    %cst_4 = arith.constant 1.000000e+00 : f32
    %13 = vector.broadcast %cst_4 : f32 to vector<100x1xf32>
    %14 = arith.mulf %13, %12 : vector<100x1xf32>
    %15 = vector.broadcast %14 : vector<100x1xf32> to vector<100x32xf32>
    %16 = arith.mulf %6, %15 : vector<100x32xf32>
    %c0_5 = arith.constant 0 : index
    %c0_6 = arith.constant 0 : index
    %17 = vector.load %arg2[%c0_5, %c0_6] : memref<100x32xf32, #tpu.memory_space<vmem>>, vector<100x32xf32>
    tpu.vector_store %arg2[%c0_5, %c0_6], %16 {strides = array<i32>} : memref<100x32xf32, #tpu.memory_space<vmem>>, vector<100x32xf32>,
    return
  }
  func.func @transform_0(%arg0: i32) -> (i32, i32) {
    %c0_i32 = arith.constant 0 : i32
    %c0_i32_0 = arith.constant 0 : i32
    %c0_i32_1 = arith.constant 0 : i32
    return %c0_i32, %c0_i32_0 : i32, i32
  }
  func.func @transform_1(%arg0: i32) -> (i32, i32) {
    %c0_i32 = arith.constant 0 : i32
    %c0_i32_0 = arith.constant 0 : i32
    %c0_i32_1 = arith.constant 0 : i32
    return %c0_i32, %c0_i32_0 : i32, i32
  }
}

</mosaic_0001>

<llo_original>
// kernel: tpu_custom_call.1
$region0: #{tpu_custom_call.1}
  #allocation0 [shape = 'u32[]', space=smem, size = 0x4, offset = 0x4, fixed_abs, tag = 'smem constant byte address 0x4 - core index']
  #allocation1 [shape = 'u32[72,128]{1,0:T(1,128)}', space=vmem, size = 0x9000, scoped, tag = 'internal scratch']
  %s0 = inlined_call_operand.vmem [shape: f32[100,32], index: 0, kind: input, shape index: {}]
  %s1 = inlined_call_operand.vmem [shape: f32[100,32], index: 1, kind: output, shape index: {}]
  %s2 = sld [smem:[#allocation0]]
  $region14: #{tpu_custom_call.1} parent=0
    _
  %s4 = ssub.s32 1, %s2
  %s5 = scalar_select 0, %s4, %s2
  // Predicated region
  $region2: #{tpu_custom_call.1} parent=0 // pred_check
    _
  $region3: #{tpu_custom_call.1} parent=0 // pred_check_branch
    %7 = sbr.rel (0) target = $region5
  $region4: #{tpu_custom_call.1} parent=0 // pred_region
    _
  $region5: #{tpu_custom_call.1} parent=0 // pred_fallthru
    _
  %v8 = vld [vmem:[%s0] sm:$0xff]
  %v9 = vld [vmem:[%s0 + $0x8] sm:$0xff]
  %v10 = vld [vmem:[%s0 + $0x10] sm:$0xff]
  %v11 = vld [vmem:[%s0 + $0x18] sm:$0xff]
  %v12 = vld [vmem:[%s0 + $0x20] sm:$0xff]
  %v13 = vld [vmem:[%s0 + $0x28] sm:$0xff]
  %v14 = vld [vmem:[%s0 + $0x30] sm:$0xff]
  %v15 = vld [vmem:[%s0 + $0x38] sm:$0xff]
  %v16 = vld [vmem:[%s0 + $0x40] sm:$0xff]
  %v17 = vld [vmem:[%s0 + $0x48] sm:$0xff]
  %v18 = vld [vmem:[%s0 + $0x50] sm:$0xff]
  %v19 = vld [vmem:[%s0 + $0x58] sm:$0xff]
  %v20 = vld [vmem:[%s0 + $0x60] sm:$0xf]
  %vm21 = vcmask 261120
  %v22 = vsel %vm21, %v8, 0.0
  %v23 = vsel %vm21, %v9, 0.0
  %v24 = vadd.f32 %v22, %v23
  %v25 = vsel %vm21, %v10, 0.0
  %v26 = vadd.f32 %v24, %v25
  %v27 = vsel %vm21, %v11, 0.0
  %v28 = vadd.f32 %v26, %v27
  %v29 = vsel %vm21, %v12, 0.0
  %v30 = vadd.f32 %v28, %v29
  %v31 = vsel %vm21, %v13, 0.0
  %v32 = vadd.f32 %v30, %v31
  %v33 = vsel %vm21, %v14, 0.0
  %v34 = vadd.f32 %v32, %v33
  %v35 = vsel %vm21, %v15, 0.0
  %v36 = vadd.f32 %v34, %v35
  %v37 = vsel %vm21, %v16, 0.0
  %v38 = vadd.f32 %v36, %v37
  %v39 = vsel %vm21, %v17, 0.0
  %v40 = vadd.f32 %v38, %v39
  %v41 = vsel %vm21, %v18, 0.0
  %v42 = vadd.f32 %v40, %v41
  %v43 = vsel %vm21, %v19, 0.0
  %v44 = vadd.f32 %v42, %v43
  %vm45 = vcmask 257024
  %v46 = vsel %vm45, %v20, 0.0
  %v47 = vadd.f32 %v44, %v46
  %v48 = vrot.slane %v47, 4
  %v49 = vadd.f32 %v47, %v48
  %v50 = vrot.slane %v49, 2
  %v51 = vadd.f32 %v49, %v50
  %v52 = vrot.slane %v51, 1
  %v53 = vadd.f32 %v51, %v52
  %v54 = vmul.f32 %v53, 0.01
  %v55 = vsub.f32 %v8, %v54
  %v56 = vsub.f32 %v9, %v54
  %v57 = vsub.f32 %v10, %v54
  %v58 = vsub.f32 %v11, %v54
  %v59 = vsub.f32 %v12, %v54
  %v60 = vsub.f32 %v13, %v54
  %v61 = vsub.f32 %v14, %v54
  %v62 = vsub.f32 %v15, %v54
  %v63 = vsub.f32 %v16, %v54
  %v64 = vsub.f32 %v17, %v54
  %v65 = vsub.f32 %v18, %v54
  %v66 = vsub.f32 %v19, %v54
  %v67 = vsub.f32 %v20, %v54
  %v68 = vmul.f32 %v55, %v55
  %v69 = vmul.f32 %v56, %v56
  %v70 = vmul.f32 %v57, %v57
  %v71 = vmul.f32 %v58, %v58
  %v72 = vmul.f32 %v59, %v59
  %v73 = vmul.f32 %v60, %v60
  %v74 = vmul.f32 %v61, %v61
  %v75 = vmul.f32 %v62, %v62
  %v76 = vmul.f32 %v63, %v63
  %v77 = vmul.f32 %v64, %v64
  %v78 = vmul.f32 %v65, %v65
  %v79 = vmul.f32 %v66, %v66
  %v80 = vmul.f32 %v67, %v67
  %v81 = vsel %vm21, %v68, 0.0
  %82 = vadd.xlane.f32.xlu0 %v81
  %v83 = vpop.xlane.xlu0 %82
  %v84 = vsel %vm21, %v69, 0.0
  %85 = vadd.xlane.f32.xlu0 %v84
  %v86 = vpop.xlane.xlu0 %85
  %v87 = vsel %vm21, %v70, 0.0
  %88 = vadd.xlane.f32.xlu0 %v87
  %v89 = vpop.xlane.xlu0 %88
  %v90 = vsel %vm21, %v71, 0.0
  %91 = vadd.xlane.f32.xlu0 %v90
  %v92 = vpop.xlane.xlu0 %91
  %v93 = vsel %vm21, %v72, 0.0
  %94 = vadd.xlane.f32.xlu0 %v93
  %v95 = vpop.xlane.xlu0 %94
  %v96 = vsel %vm21, %v73, 0.0
  %97 = vadd.xlane.f32.xlu0 %v96
  %v98 = vpop.xlane.xlu0 %97
  %v99 = vsel %vm21, %v74, 0.0
  %100 = vadd.xlane.f32.xlu0 %v99
  %v101 = vpop.xlane.xlu0 %100
  %v102 = vsel %vm21, %v75, 0.0
  %103 = vadd.xlane.f32.xlu0 %v102
  %v104 = vpop.xlane.xlu0 %103
  %v105 = vsel %vm21, %v76, 0.0
  %106 = vadd.xlane.f32.xlu0 %v105
  %v107 = vpop.xlane.xlu0 %106
  %v108 = vsel %vm21, %v77, 0.0
  %109 = vadd.xlane.f32.xlu0 %v108
  %v110 = vpop.xlane.xlu0 %109
  %v111 = vsel %vm21, %v78, 0.0
  %112 = vadd.xlane.f32.xlu0 %v111
  %v113 = vpop.xlane.xlu0 %112
  %v114 = vsel %vm21, %v79, 0.0
  %115 = vadd.xlane.f32.xlu0 %v114
  %v116 = vpop.xlane.xlu0 %115
  %v117 = vsel %vm45, %v80, 0.0
  %118 = vadd.xlane.f32.xlu0 %v117
  %v119 = vpop.xlane.xlu0 %118
  %v120 = vadd.f32 %v83, 1e-06
  %v121 = vadd.f32 %v86, 1e-06
  %v122 = vadd.f32 %v89, 1e-06
  %v123 = vadd.f32 %v92, 1e-06
  %v124 = vadd.f32 %v95, 1e-06
  %v125 = vadd.f32 %v98, 1e-06
  %v126 = vadd.f32 %v101, 1e-06
  %v127 = vadd.f32 %v104, 1e-06
  %v128 = vadd.f32 %v107, 1e-06
  %v129 = vadd.f32 %v110, 1e-06
  %v130 = vadd.f32 %v113, 1e-06
  %v131 = vadd.f32 %v116, 1e-06
  %v132 = vadd.f32 %v119, 1e-06
  %v133 = vrsqrt.pop %v120
  %v134 = vmul.f32 %v133, %v120
  %v135 = vmul.f32 %v134, %v133
  %v136 = vmul.f32 0.5, %v135
  %v137 = vsub.f32 1.5, %v136
  %v138 = vmul.f32 %v133, %v137
  %vm139 = vweird.f32 %v120
  %vm140 = vweird.f32 %v133
  %vm141 = vmor %vm139, %vm140
  %v142 = vsel %vm141, %v133, %v138
  %v143 = vrsqrt.pop %v121
  %v144 = vmul.f32 %v143, %v121
  %v145 = vmul.f32 %v144, %v143
  %v146 = vmul.f32 0.5, %v145
  %v147 = vsub.f32 1.5, %v146
  %v148 = vmul.f32 %v143, %v147
  %vm149 = vweird.f32 %v121
  %vm150 = vweird.f32 %v143
  %vm151 = vmor %vm149, %vm150
  %v152 = vsel %vm151, %v143, %v148
  %v153 = vrsqrt.pop %v122
  %v154 = vmul.f32 %v153, %v122
  %v155 = vmul.f32 %v154, %v153
  %v156 = vmul.f32 0.5, %v155
  %v157 = vsub.f32 1.5, %v156
  %v158 = vmul.f32 %v153, %v157
  %vm159 = vweird.f32 %v122
  %vm160 = vweird.f32 %v153
  %vm161 = vmor %vm159, %vm160
  %v162 = vsel %vm161, %v153, %v158
  %v163 = vrsqrt.pop %v123
  %v164 = vmul.f32 %v163, %v123
  %v165 = vmul.f32 %v164, %v163
  %v166 = vmul.f32 0.5, %v165
  %v167 = vsub.f32 1.5, %v166
  %v168 = vmul.f32 %v163, %v167
  %vm169 = vweird.f32 %v123
  %vm170 = vweird.f32 %v163
  %vm171 = vmor %vm169, %vm170
  %v172 = vsel %vm171, %v163, %v168
  %v173 = vrsqrt.pop %v124
  %v174 = vmul.f32 %v173, %v124
  %v175 = vmul.f32 %v174, %v173
  %v176 = vmul.f32 0.5, %v175
  %v177 = vsub.f32 1.5, %v176
  %v178 = vmul.f32 %v173, %v177
  %vm179 = vweird.f32 %v124
  %vm180 = vweird.f32 %v173
  %vm181 = vmor %vm179, %vm180
  %v182 = vsel %vm181, %v173, %v178
  %v183 = vrsqrt.pop %v125
  %v184 = vmul.f32 %v183, %v125
  %v185 = vmul.f32 %v184, %v183
  %v186 = vmul.f32 0.5, %v185
  %v187 = vsub.f32 1.5, %v186
  %v188 = vmul.f32 %v183, %v187
  %vm189 = vweird.f32 %v125
  %vm190 = vweird.f32 %v183
  %vm191 = vmor %vm189, %vm190
  %v192 = vsel %vm191, %v183, %v188
  %v193 = vrsqrt.pop %v126
  %v194 = vmul.f32 %v193, %v126
  %v195 = vmul.f32 %v194, %v193
  %v196 = vmul.f32 0.5, %v195
  %v197 = vsub.f32 1.5, %v196
  %v198 = vmul.f32 %v193, %v197
  %vm199 = vweird.f32 %v126
  %vm200 = vweird.f32 %v193
  %vm201 = vmor %vm199, %vm200
  %v202 = vsel %vm201, %v193, %v198
  %v203 = vrsqrt.pop %v127
  %v204 = vmul.f32 %v203, %v127
  %v205 = vmul.f32 %v204, %v203
  %v206 = vmul.f32 0.5, %v205
  %v207 = vsub.f32 1.5, %v206
  %v208 = vmul.f32 %v203, %v207
  %vm209 = vweird.f32 %v127
  %vm210 = vweird.f32 %v203
  %vm211 = vmor %vm209, %vm210
  %v212 = vsel %vm211, %v203, %v208
  %v213 = vrsqrt.pop %v128
  %v214 = vmul.f32 %v213, %v128
  %v215 = vmul.f32 %v214, %v213
  %v216 = vmul.f32 0.5, %v215
  %v217 = vsub.f32 1.5, %v216
  %v218 = vmul.f32 %v213, %v217
  %vm219 = vweird.f32 %v128
  %vm220 = vweird.f32 %v213
  %vm221 = vmor %vm219, %vm220
  %v222 = vsel %vm221, %v213, %v218
  %v223 = vrsqrt.pop %v129
  %v224 = vmul.f32 %v223, %v129
  %v225 = vmul.f32 %v224, %v223
  %v226 = vmul.f32 0.5, %v225
  %v227 = vsub.f32 1.5, %v226
  %v228 = vmul.f32 %v223, %v227
  %vm229 = vweird.f32 %v129
  %vm230 = vweird.f32 %v223
  %vm231 = vmor %vm229, %vm230
  %v232 = vsel %vm231, %v223, %v228
  %v233 = vrsqrt.pop %v130
  %v234 = vmul.f32 %v233, %v130
  %v235 = vmul.f32 %v234, %v233
  %v236 = vmul.f32 0.5, %v235
  %v237 = vsub.f32 1.5, %v236
  %v238 = vmul.f32 %v233, %v237
  %vm239 = vweird.f32 %v130
  %vm240 = vweird.f32 %v233
  %vm241 = vmor %vm239, %vm240
  %v242 = vsel %vm241, %v233, %v238
  %v243 = vrsqrt.pop %v131
  %v244 = vmul.f32 %v243, %v131
  %v245 = vmul.f32 %v244, %v243
  %v246 = vmul.f32 0.5, %v245
  %v247 = vsub.f32 1.5, %v246
  %v248 = vmul.f32 %v243, %v247
  %vm249 = vweird.f32 %v131
  %vm250 = vweird.f32 %v243
  %vm251 = vmor %vm249, %vm250
  %v252 = vsel %vm251, %v243, %v248
  %v253 = vrsqrt.pop %v132
  %v254 = vmul.f32 %v253, %v132
  %v255 = vmul.f32 %v254, %v253
  %v256 = vmul.f32 0.5, %v255
  %v257 = vsub.f32 1.5, %v256
  %v258 = vmul.f32 %v253, %v257
  %vm259 = vweird.f32 %v132
  %vm260 = vweird.f32 %v253
  %vm261 = vmor %vm259, %vm260
  %v262 = vsel %vm261, %v253, %v258
  %v263 = vmul.f32 %v55, %v142
  %v264 = vmul.f32 %v56, %v152
  %v265 = vmul.f32 %v57, %v162
  %v266 = vmul.f32 %v58, %v172
  %v267 = vmul.f32 %v59, %v182
  %v268 = vmul.f32 %v60, %v192
  %v269 = vmul.f32 %v61, %v202
  %v270 = vmul.f32 %v62, %v212
  %v271 = vmul.f32 %v63, %v222
  %v272 = vmul.f32 %v64, %v232
  %v273 = vmul.f32 %v65, %v242
  %v274 = vmul.f32 %v66, %v252
  %v275 = vmul.f32 %v67, %v262
  %276 = vst.msk [vmem:[%s1] sm:$0xff] %vm21, %v263
  %277 = vst.msk [vmem:[%s1 + $0x8] sm:$0xff] %vm21, %v264
  %278 = vst.msk [vmem:[%s1 + $0x10] sm:$0xff] %vm21, %v265
  %279 = vst.msk [vmem:[%s1 + $0x18] sm:$0xff] %vm21, %v266
  %280 = vst.msk [vmem:[%s1 + $0x20] sm:$0xff] %vm21, %v267
  %281 = vst.msk [vmem:[%s1 + $0x28] sm:$0xff] %vm21, %v268
  %282 = vst.msk [vmem:[%s1 + $0x30] sm:$0xff] %vm21, %v269
  %283 = vst.msk [vmem:[%s1 + $0x38] sm:$0xff] %vm21, %v270
  %284 = vst.msk [vmem:[%s1 + $0x40] sm:$0xff] %vm21, %v271
  %285 = vst.msk [vmem:[%s1 + $0x48] sm:$0xff] %vm21, %v272
  %286 = vst.msk [vmem:[%s1 + $0x50] sm:$0xff] %vm21, %v273
  %287 = vst.msk [vmem:[%s1 + $0x58] sm:$0xff] %vm21, %v274
  %288 = vst.msk [vmem:[%s1 + $0x60] sm:$0xf] %vm45, %v275
  // Predicated region
  $region6: #{tpu_custom_call.1} parent=0 // pred_check
    _
  $region7: #{tpu_custom_call.1} parent=0 // pred_check_branch
    %290 = sbr.rel (0) target = $region9
  $region8: #{tpu_custom_call.1} parent=0 // pred_region
    _
  $region9: #{tpu_custom_call.1} parent=0 // pred_fallthru
    _
  // Predicated region
  $region10: #{tpu_custom_call.1} parent=0 // pred_check
    _
  $region11: #{tpu_custom_call.1} parent=0 // pred_check_branch
    %292 = sbr.rel (0) target = $region13
  $region12: #{tpu_custom_call.1} parent=0 // pred_region
    _
  $region13: #{tpu_custom_call.1} parent=0 // pred_fallthru
    _

</llo_original>
